<compile_context>
chip_gen: v7x
topology: tpu7x:2x2x1
jax: 0.10.0
libtpu: 0.0.40
codegen_flags: <defaults>
</compile_context>

<pallas_src>
import jax
import jax.numpy as jnp
from jax.experimental import pallas as pl
from jax.experimental.pallas import tpu as pltpu


def _round_up(x, m):
    return ((x + m - 1) // m) * m


def _cdiv(a, b):
    return (a + b - 1) // b


def _masked_mse_kernel(out_ref, tgt_ref, mask_ref, lsum_ref, msum_ref,
                       lacc_ref, macc_ref):
    t = pl.program_id(1)
    nt = pl.num_programs(1)

    # Reset the per-batch-row accumulators at the start of each batch row.
    @pl.when(t == 0)
    def _():
        lacc_ref[...] = jnp.zeros_like(lacc_ref)
        macc_ref[...] = jnp.zeros_like(macc_ref)

    # (T_TILE, D) squared error in f32 (inputs may be bf16; upcast preserved).
    diff = out_ref[...].astype(jnp.float32) - tgt_ref[...].astype(jnp.float32)
    m = mask_ref[...].astype(jnp.float32)            # (T_TILE, 1)
    msq = diff * diff * m                            # (T_TILE, D), lane-broadcast mask

    t_tile, d = msq.shape
    # Sublane regrouping (layout-trivial) + leading-axis sum == pure VPU adds.
    lacc_ref[...] += msq.reshape(t_tile // 8, 8, d).sum(axis=0)   # (8, D)
    macc_ref[...] += m.reshape(t_tile // 8, 8, 1).sum(axis=0)     # (8, 1)

    # One cross-lane reduce + 1-element store per batch row, on its last step.
    @pl.when(t == nt - 1)
    def _():
        lsum_ref[...] = jnp.sum(lacc_ref[...], keepdims=True)
        msum_ref[...] = jnp.sum(macc_ref[...], keepdims=True)


def masked_mse_loss(outputs, targets, mask, *, target_tile_bytes=4 * 1024 * 1024):
    assert outputs.shape == targets.shape, "outputs and targets must have the same shape"
    B, T, D = outputs.shape
    assert mask.shape == (B, T), "mask must have shape (batch_size, timesteps)"

    elem_bytes = max(jnp.dtype(outputs.dtype).itemsize,
                     jnp.dtype(targets.dtype).itemsize)

    # Pick a timestep tile: multiple of 8 rows, ~target_tile_bytes per input
    # tile, minimal zero-padding of T.
    t8 = _round_up(max(T, 1), 8)
    max_rows = max(8, (target_tile_bytes // max(1, D * elem_bytes)) // 8 * 8)
    t_tile_max = min(max_rows, t8)
    num_t_tiles = _cdiv(t8, t_tile_max)
    t_tile = _round_up(_cdiv(T, num_t_tiles), 8)
    t_pad = num_t_tiles * t_tile

    if t_pad != T:
        pad = t_pad - T
        outputs = jnp.pad(outputs, ((0, 0), (0, pad), (0, 0)))
        targets = jnp.pad(targets, ((0, 0), (0, pad), (0, 0)))
        mask = jnp.pad(mask, ((0, 0), (0, pad)))

    # (B, T_pad, 1) f32 mask so its block DMA lines up with the data tiles.
    mask3 = mask.astype(jnp.float32)[:, :, None]

    loss_partials, mask_partials = pl.pallas_call(
        _masked_mse_kernel,
        out_shape=(
            jax.ShapeDtypeStruct((B, 1, 1), jnp.float32),   # per-batch loss partials
            jax.ShapeDtypeStruct((B, 1, 1), jnp.float32),   # per-batch mask partials
        ),
        grid_spec=pltpu.PrefetchScalarGridSpec(
            num_scalar_prefetch=0,
            grid=(B, num_t_tiles),
            in_specs=[
                pl.BlockSpec((None, t_tile, D), lambda b, t: (b, t, 0)),  # outputs tile
                pl.BlockSpec((None, t_tile, D), lambda b, t: (b, t, 0)),  # targets tile
                pl.BlockSpec((None, t_tile, 1), lambda b, t: (b, t, 0)),  # mask tile
            ],
            out_specs=(
                pl.BlockSpec((None, 1, 1), lambda b, t: (b, 0, 0)),
                pl.BlockSpec((None, 1, 1), lambda b, t: (b, 0, 0)),
            ),
            scratch_shapes=[
                pltpu.VMEM((8, D), jnp.float32),   # loss accumulator (lane-dense)
                pltpu.VMEM((8, 1), jnp.float32),   # mask accumulator
            ],
        ),
        compiler_params=pltpu.CompilerParams(
            dimension_semantics=("parallel", "arbitrary"),
            vmem_limit_bytes=32 * 1024 * 1024,     # safe on v5e/v6e (128 MiB) and v7x (64 MiB)
        ),
    )(outputs, targets, mask3)

    return jnp.sum(loss_partials) / jnp.sum(mask_partials)


if __name__ == "__main__":
    # Small shapes consistent with the module: batch=2, timesteps=8, features=32.
    B, T, D = 2, 8, 32
    key = jax.random.PRNGKey(0)
    k1, k2, k3 = jax.random.split(key, 3)

    outputs = jax.random.normal(k1, (B, T, D), dtype=jnp.float32)
    targets = jax.random.normal(k2, (B, T, D), dtype=jnp.float32)
    # Binary mask over (batch, timesteps).
    mask = (jax.random.uniform(k3, (B, T)) > 0.3).astype(jnp.float32)

    result = masked_mse_loss(outputs, targets, mask)
    result = jax.block_until_ready(result)

    # Pure-JAX reference (identical to the PyTorch forward).
    m3 = mask[:, :, None]
    ref = jnp.sum((outputs - targets) ** 2 * m3) / jnp.sum(m3)
    assert jnp.allclose(result, ref, rtol=1e-5, atol=1e-5), (result, ref)

    print("KERNEL_OK")
</pallas_src>

<mosaic_0001>
module attributes {stable_mosaic.version = 11 : i64} {
  func.func @_masked_mse_kernel(%arg0: i32, %arg1: i32, %arg2: memref<1x8x32xf32, #tpu.memory_space<vmem>>, %arg3: memref<1x8x32xf32, #tpu.memory_space<vmem>>, %arg4: memref<1x8x1xf32, #tpu.memory_space<vmem>>, %arg5: memref<1x1x1xf32, #tpu.memory_space<vmem>>, %arg6: memref<1x1x1xf32, #tpu.memory_space<vmem>>, %arg7: memref<8x32xf32, #tpu.memory_space<vmem>>, %arg8: memref<8x1xf32, #tpu.memory_space<vmem>>) attributes {dimension_semantics = [#tpu.dimension_semantics<parallel>, #tpu.dimension_semantics<arbitrary>], iteration_bounds = array<i64: 2, 1>, scalar_prefetch = 0 : i64, scratch_operands = 2 : i64, tpu.core_type = #tpu.core_type<tc>, window_params = [{transform_indices = @transform_0, window_bounds = array<i64: 1, 8, 32>}, {transform_indices = @transform_1, window_bounds = array<i64: 1, 8, 32>}, {transform_indices = @transform_2, window_bounds = array<i64: 1, 8, 1>}, {transform_indices = @transform_3, window_bounds = array<i64: 1, 1, 1>}, {transform_indices = @transform_4, window_bounds = array<i64: 1, 1, 1>}]} {
    %c0_i32 = arith.constant 0 : i32
    %0 = arith.cmpi eq, %arg1, %c0_i32 : i32
    %1 = arith.extui %0 : i1 to i32
    %c0_i32_0 = arith.constant 0 : i32
    %2 = arith.cmpi ne, %1, %c0_i32_0 : i32
    scf.if %2 {
      %cst_20 = arith.constant 0.000000e+00 : f32
      %26 = vector.broadcast %cst_20 : f32 to vector<8x32xf32>
      %c0_21 = arith.constant 0 : index
      %c0_22 = arith.constant 0 : index
      %27 = vector.load %arg7[%c0_21, %c0_22] : memref<8x32xf32, #tpu.memory_space<vmem>>, vector<8x32xf32>
      tpu.vector_store %arg7[%c0_21, %c0_22], %26 {strides = array<i32>} : memref<8x32xf32, #tpu.memory_space<vmem>>, vector<8x32xf32>,
      %cst_23 = arith.constant 0.000000e+00 : f32
      %28 = vector.broadcast %cst_23 : f32 to vector<8x1xf32>
      %c0_24 = arith.constant 0 : index
      %c0_25 = arith.constant 0 : index
      %29 = vector.load %arg8[%c0_24, %c0_25] : memref<8x1xf32, #tpu.memory_space<vmem>>, vector<8x1xf32>
      tpu.vector_store %arg8[%c0_24, %c0_25], %28 {strides = array<i32>} : memref<8x1xf32, #tpu.memory_space<vmem>>, vector<8x1xf32>,
    } else {
    }
    %c0 = arith.constant 0 : index
    %c0_1 = arith.constant 0 : index
    %c0_2 = arith.constant 0 : index
    %3 = vector.load %arg2[%c0, %c0_1, %c0_2] : memref<1x8x32xf32, #tpu.memory_space<vmem>>, vector<1x8x32xf32>
    %4 = vector.shape_cast %3 : vector<1x8x32xf32> to vector<8x32xf32>
    %c0_3 = arith.constant 0 : index
    %c0_4 = arith.constant 0 : index
    %c0_5 = arith.constant 0 : index
    %5 = vector.load %arg3[%c0_3, %c0_4, %c0_5] : memref<1x8x32xf32, #tpu.memory_space<vmem>>, vector<1x8x32xf32>
    %6 = vector.shape_cast %5 : vector<1x8x32xf32> to vector<8x32xf32>
    %7 = arith.subf %4, %6 : vector<8x32xf32>
    %c0_6 = arith.constant 0 : index
    %c0_7 = arith.constant 0 : index
    %c0_8 = arith.constant 0 : index
    %8 = vector.load %arg4[%c0_6, %c0_7, %c0_8] : memref<1x8x1xf32, #tpu.memory_space<vmem>>, vector<1x8x1xf32>
    %9 = vector.shape_cast %8 : vector<1x8x1xf32> to vector<8x1xf32>
    %10 = arith.mulf %7, %7 : vector<8x32xf32>
    %11 = vector.broadcast %9 : vector<8x1xf32> to vector<8x32xf32>
    %12 = arith.mulf %10, %11 : vector<8x32xf32>
    %c0_9 = arith.constant 0 : index
    %c0_10 = arith.constant 0 : index
    %13 = vector.load %arg7[%c0_9, %c0_10] : memref<8x32xf32, #tpu.memory_space<vmem>>, vector<8x32xf32>
    %14 = vector.shape_cast %12 : vector<8x32xf32> to vector<1x8x32xf32>
    %cst = arith.constant dense<0.000000e+00> : vector<8x32xf32>
    %15 = vector.multi_reduction <add>, %14, %cst [0] : vector<1x8x32xf32> to vector<8x32xf32>
    %16 = arith.addf %13, %15 : vector<8x32xf32>
    %c0_11 = arith.constant 0 : index
    %c0_12 = arith.constant 0 : index
    %17 = vector.load %arg7[%c0_11, %c0_12] : memref<8x32xf32, #tpu.memory_space<vmem>>, vector<8x32xf32>
    tpu.vector_store %arg7[%c0_11, %c0_12], %16 {strides = array<i32>} : memref<8x32xf32, #tpu.memory_space<vmem>>, vector<8x32xf32>,
    %c0_13 = arith.constant 0 : index
    %c0_14 = arith.constant 0 : index
    %18 = vector.load %arg8[%c0_13, %c0_14] : memref<8x1xf32, #tpu.memory_space<vmem>>, vector<8x1xf32>
    %19 = vector.shape_cast %9 : vector<8x1xf32> to vector<1x8x1xf32>
    %cst_15 = arith.constant dense<0.000000e+00> : vector<8x1xf32>
    %20 = vector.multi_reduction <add>, %19, %cst_15 [0] : vector<1x8x1xf32> to vector<8x1xf32>
    %21 = arith.addf %18, %20 : vector<8x1xf32>
    %c0_16 = arith.constant 0 : index
    %c0_17 = arith.constant 0 : index
    %22 = vector.load %arg8[%c0_16, %c0_17] : memref<8x1xf32, #tpu.memory_space<vmem>>, vector<8x1xf32>
    tpu.vector_store %arg8[%c0_16, %c0_17], %21 {strides = array<i32>} : memref<8x1xf32, #tpu.memory_space<vmem>>, vector<8x1xf32>,
    %c0_i32_18 = arith.constant 0 : i32
    %23 = arith.cmpi eq, %arg1, %c0_i32_18 : i32
    %24 = arith.extui %23 : i1 to i32
    %c0_i32_19 = arith.constant 0 : i32
    %25 = arith.cmpi ne, %24, %c0_i32_19 : i32
    scf.if %25 {
      %c0_20 = arith.constant 0 : index
      %c0_21 = arith.constant 0 : index
      %26 = vector.load %arg7[%c0_20, %c0_21] : memref<8x32xf32, #tpu.memory_space<vmem>>, vector<8x32xf32>
      %27 = vector.shape_cast %26 : vector<8x32xf32> to vector<1x8x32xf32>
      %cst_22 = arith.constant dense<0.000000e+00> : vector<1xf32>
      %28 = vector.multi_reduction <add>, %27, %cst_22 [1, 2] : vector<1x8x32xf32> to vector<1xf32>
      %29 = vector.shape_cast %28 : vector<1xf32> to vector<1x1x1xf32>
      %30 = vector.extract %29[0, 0, 0] : f32 from vector<1x1x1xf32>
      %31 = vector.broadcast %30 : f32 to vector<1x1xf32>
      %c0_23 = arith.constant 0 : index
      %c0_24 = arith.constant 0 : index
      %c0_25 = arith.constant 0 : index
      %32 = vector.load %arg5[%c0_23, %c0_24, %c0_25] : memref<1x1x1xf32, #tpu.memory_space<vmem>>, vector<1x1x1xf32>
      %33 = vector.shape_cast %32 : vector<1x1x1xf32> to vector<1x1xf32>
      %34 = vector.shape_cast %31 : vector<1x1xf32> to vector<1x1x1xf32>
      tpu.vector_store %arg5[%c0_23, %c0_24, %c0_25], %34 {strides = array<i32>} : memref<1x1x1xf32, #tpu.memory_space<vmem>>, vector<1x1x1xf32>,
      %c0_26 = arith.constant 0 : index
      %c0_27 = arith.constant 0 : index
      %35 = vector.load %arg8[%c0_26, %c0_27] : memref<8x1xf32, #tpu.memory_space<vmem>>, vector<8x1xf32>
      %36 = vector.shape_cast %35 : vector<8x1xf32> to vector<1x8x1xf32>
      %cst_28 = arith.constant dense<0.000000e+00> : vector<1xf32>
      %37 = vector.multi_reduction <add>, %36, %cst_28 [1, 2] : vector<1x8x1xf32> to vector<1xf32>
      %38 = vector.shape_cast %37 : vector<1xf32> to vector<1x1x1xf32>
      %39 = vector.extract %38[0, 0, 0] : f32 from vector<1x1x1xf32>
      %40 = vector.broadcast %39 : f32 to vector<1x1xf32>
      %c0_29 = arith.constant 0 : index
      %c0_30 = arith.constant 0 : index
      %c0_31 = arith.constant 0 : index
      %41 = vector.load %arg6[%c0_29, %c0_30, %c0_31] : memref<1x1x1xf32, #tpu.memory_space<vmem>>, vector<1x1x1xf32>
      %42 = vector.shape_cast %41 : vector<1x1x1xf32> to vector<1x1xf32>
      %43 = vector.shape_cast %40 : vector<1x1xf32> to vector<1x1x1xf32>
      tpu.vector_store %arg6[%c0_29, %c0_30, %c0_31], %43 {strides = array<i32>} : memref<1x1x1xf32, #tpu.memory_space<vmem>>, vector<1x1x1xf32>,
    } else {
    }
    return
  }
  func.func @transform_0(%arg0: i32, %arg1: i32) -> (i32, i32, i32) {
    %c0_i32 = arith.constant 0 : i32
    %c0_i32_0 = arith.constant 0 : i32
    return %arg0, %arg1, %c0_i32 : i32, i32, i32
  }
  func.func @transform_1(%arg0: i32, %arg1: i32) -> (i32, i32, i32) {
    %c0_i32 = arith.constant 0 : i32
    %c0_i32_0 = arith.constant 0 : i32
    return %arg0, %arg1, %c0_i32 : i32, i32, i32
  }
  func.func @transform_2(%arg0: i32, %arg1: i32) -> (i32, i32, i32) {
    %c0_i32 = arith.constant 0 : i32
    %c0_i32_0 = arith.constant 0 : i32
    return %arg0, %arg1, %c0_i32 : i32, i32, i32
  }
  func.func @transform_3(%arg0: i32, %arg1: i32) -> (i32, i32, i32) {
    %c0_i32 = arith.constant 0 : i32
    %c0_i32_0 = arith.constant 0 : i32
    %c0_i32_1 = arith.constant 0 : i32
    return %arg0, %c0_i32, %c0_i32_0 : i32, i32, i32
  }
  func.func @transform_4(%arg0: i32, %arg1: i32) -> (i32, i32, i32) {
    %c0_i32 = arith.constant 0 : i32
    %c0_i32_0 = arith.constant 0 : i32
    %c0_i32_1 = arith.constant 0 : i32
    return %arg0, %c0_i32, %c0_i32_0 : i32, i32, i32
  }
}

</mosaic_0001>

<llo_original>
// kernel: tpu_custom_call.1
$region0: #{tpu_custom_call.1}
  #allocation0 [shape = 'u32[]', space=smem, size = 0x4, offset = 0x4, fixed_abs, tag = 'smem constant byte address 0x4 - core index']
  #allocation1 [shape = 'u32[144,128]{1,0:T(1,128)}', space=vmem, size = 0x12000, scoped, tag = 'internal scratch']
  #allocation2 [shape = 'f32[8,32]{1,0:T(8,128)}', space=vmem, size = 0x1000, scoped, tag = 'scratch operand']
  #allocation3 [shape = 'f32[8,1]{1,0:T(8,128)}', space=vmem, size = 0x1000, scoped, tag = 'scratch operand']
  %s0 = inlined_call_operand.vmem [shape: f32[2,8,32], index: 0, kind: input, shape index: {}]
  %s1 = inlined_call_operand.hbm [shape: f32[2,8,32], index: 1, kind: input, shape index: {}]
  %s2 = inlined_call_operand.vmem [shape: f32[2,8,1], index: 2, kind: input, shape index: {}]
  %s3 = inlined_call_operand.vmem [shape: f32[2,1,1], index: 3, kind: output, shape index: {0}]
  %s4 = inlined_call_operand.vmem [shape: f32[2,1,1], index: 4, kind: output, shape index: {1}]
  %5 = xla_tuple %s3, %s4
  %s6 = sld [smem:[#allocation0]]
  $region65: #{tpu_custom_call.1} parent=0
    _
  %s8 = ssub.s32 1, %s6
  %s9 = scalar_select 0, %s8, %s6
  $region1: #{tpu_custom_call.1} parent=0
    #allocation4 [shape = 'u8[8192]{0}', space=vmem, size = 0x2000, scoped, tag = 'input window, operand 1']
    #allocation5 [shape = 's32[2]{0}', space=sflag, size = 0x8, scoped, tag = 'scoped memory for tpu_custom_call.1']
    %10 = vsyncpa [#allocation5], 0
    %s11 = scalar_lea.sflag [#allocation5], 1
    %12 = vsyncpa %s11, 0
    loop: start=0, step=1, limit=4
    $region2: #{tpu_custom_call.1} parent=1 // loop_pre_header
      _
    $region3: #{tpu_custom_call.1} parent=1 // loop_header
      %s14 = sphi 0, %s18
      %p15 = scmp.ge.s32.totalorder %s14, 4
      %s21 = sphi 0, %s33
      %s22 = sphi 0, %s29
      %s23 = sphi 0, %s21
      %s24 = sphi 0, %s22
      %s25 = sphi 0, %s23
      %s26 = sphi 0, %s24
      %s38 = sphi 0, %s40
      %s41 = sphi 0, %s38
      %s42 = sphi 0, %s41
      %s58 = sphi 0, %s42
      %s66 = sphi 0, %s68
      %s69 = sphi 0, %s66
      %s70 = sphi 0, %s69
      %s86 = sphi 0, %s70
      %s94 = sphi 0, %s96
      %s97 = sphi 0, %s94
      %s98 = sphi 0, %s97
      %s114 = sphi 0, %s98
      %s120 = sphi 0, %s122
      %s123 = sphi 0, %s120
      %s124 = sphi 0, %s123
      %s140 = sphi 0, %s124
      %s146 = sphi 0, %s148
      %s149 = sphi 0, %s146
      %s150 = sphi 0, %s149
      %s166 = sphi 0, %s150
    $region4: #{tpu_custom_call.1} parent=1 // loop_header_branch
      %17 = sbr.rel (%p15) target = $region8
    $region5: #{tpu_custom_call.1} parent=1 // loop_body
      %s19 = ssub.s32 %s14, 1
      %s20 = ssub.s32 %s14, 2
      %s27 = sadd.s32 1, %s22
      %p28 = scmp.ge.s32.totalorder %s27, 1
      %s29 = scalar_select %p28, 0, %s27
      %s30 = sadd.s32 1, %s21
      %s31 = scalar_select %p28, %s30, %s21
      %p32 = scmp.ge.s32.totalorder %s31, 2
      %s33 = scalar_select %p32, 0, %s31
      %s34 = ssub.s32 %s21, %s33
      %s35 = ssub.s32 %s22, %s29
      %s36 = sor.u32 %s34, %s35
      %p37 = scmp.eq.s32.totalorder %s36, 0
      %s39 = sadd.s32 %s38, 1
      %s40 = scalar_select %p37, %s38, %s39
      %p43 = pneg %p37
      %p44 = scmp.eq.s32.totalorder %s14, 1
      %p45 = por %p43, %p44
      %p46 = scmp.ne.s32.totalorder %s38, %s41
      %p47 = scmp.eq.s32.totalorder %s14, 0
      %p48 = por %p46, %p47
      %p49 = scmp.ne.s32.totalorder %s38, %s41
      %p50 = scmp.eq.s32.totalorder %s19, 1
      %p51 = por %p49, %p50
      %p52 = scmp.ne.s32.totalorder %s41, %s42
      %p53 = scmp.eq.s32.totalorder %s19, 0
      %p54 = por %p52, %p53
      %p55 = scmp.ne.s32.totalorder %s41, %s42
      %p56 = scmp.eq.s32.totalorder %s20, 1
      %p57 = por %p55, %p56
      %p59 = scmp.ne.s32.totalorder %s42, %s58
      %p60 = scmp.eq.s32.totalorder %s20, 0
      %p61 = por %p59, %p60
      %s62 = ssub.s32 %s21, %s33
      %s63 = ssub.s32 %s22, %s29
      %s64 = sor.u32 %s62, %s63
      %p65 = scmp.eq.s32.totalorder %s64, 0
      %s67 = sadd.s32 %s66, 1
      %s68 = scalar_select %p65, %s66, %s67
      %p71 = pneg %p65
      %p72 = scmp.eq.s32.totalorder %s14, 1
      %p73 = por %p71, %p72
      %p74 = scmp.ne.s32.totalorder %s66, %s69
      %p75 = scmp.eq.s32.totalorder %s14, 0
      %p76 = por %p74, %p75
      %p77 = scmp.ne.s32.totalorder %s66, %s69
      %p78 = scmp.eq.s32.totalorder %s19, 1
      %p79 = por %p77, %p78
      %p80 = scmp.ne.s32.totalorder %s69, %s70
      %p81 = scmp.eq.s32.totalorder %s19, 0
      %p82 = por %p80, %p81
      %p83 = scmp.ne.s32.totalorder %s69, %s70
      %p84 = scmp.eq.s32.totalorder %s20, 1
      %p85 = por %p83, %p84
      %p87 = scmp.ne.s32.totalorder %s70, %s86
      %p88 = scmp.eq.s32.totalorder %s20, 0
      %p89 = por %p87, %p88
      %s90 = ssub.s32 %s21, %s33
      %s91 = ssub.s32 %s22, %s29
      %s92 = sor.u32 %s90, %s91
      %p93 = scmp.eq.s32.totalorder %s92, 0
      %s95 = sadd.s32 %s94, 1
      %s96 = scalar_select %p93, %s94, %s95
      %p99 = pneg %p93
      %p100 = scmp.eq.s32.totalorder %s14, 1
      %p101 = por %p99, %p100
      %p102 = scmp.ne.s32.totalorder %s94, %s97
      %p103 = scmp.eq.s32.totalorder %s14, 0
      %p104 = por %p102, %p103
      %p105 = scmp.ne.s32.totalorder %s94, %s97
      %p106 = scmp.eq.s32.totalorder %s19, 1
      %p107 = por %p105, %p106
      %p108 = scmp.ne.s32.totalorder %s97, %s98
      %p109 = scmp.eq.s32.totalorder %s19, 0
      %p110 = por %p108, %p109
      %p111 = scmp.ne.s32.totalorder %s97, %s98
      %p112 = scmp.eq.s32.totalorder %s20, 1
      %p113 = por %p111, %p112
      %p115 = scmp.ne.s32.totalorder %s98, %s114
      %p116 = scmp.eq.s32.totalorder %s20, 0
      %p117 = por %p115, %p116
      %s118 = ssub.s32 %s21, %s33
      %p119 = scmp.eq.s32.totalorder %s118, 0
      %s121 = sadd.s32 %s120, 1
      %s122 = scalar_select %p119, %s120, %s121
      %p125 = pneg %p119
      %p126 = scmp.eq.s32.totalorder %s14, 1
      %p127 = por %p125, %p126
      %p128 = scmp.ne.s32.totalorder %s120, %s123
      %p129 = scmp.eq.s32.totalorder %s14, 0
      %p130 = por %p128, %p129
      %p131 = scmp.ne.s32.totalorder %s120, %s123
      %p132 = scmp.eq.s32.totalorder %s19, 1
      %p133 = por %p131, %p132
      %p134 = scmp.ne.s32.totalorder %s123, %s124
      %p135 = scmp.eq.s32.totalorder %s19, 0
      %p136 = por %p134, %p135
      %p137 = scmp.ne.s32.totalorder %s123, %s124
      %p138 = scmp.eq.s32.totalorder %s20, 1
      %p139 = por %p137, %p138
      %p141 = scmp.ne.s32.totalorder %s124, %s140
      %p142 = scmp.eq.s32.totalorder %s20, 0
      %p143 = por %p141, %p142
      %s144 = ssub.s32 %s21, %s33
      %p145 = scmp.eq.s32.totalorder %s144, 0
      %s147 = sadd.s32 %s146, 1
      %s148 = scalar_select %p145, %s146, %s147
      %p151 = pneg %p145
      %p152 = scmp.eq.s32.totalorder %s14, 1
      %p153 = por %p151, %p152
      %p154 = scmp.ne.s32.totalorder %s146, %s149
      %p155 = scmp.eq.s32.totalorder %s14, 0
      %p156 = por %p154, %p155
      %p157 = scmp.ne.s32.totalorder %s146, %s149
      %p158 = scmp.eq.s32.totalorder %s19, 1
      %p159 = por %p157, %p158
      %p160 = scmp.ne.s32.totalorder %s149, %s150
      %p161 = scmp.eq.s32.totalorder %s19, 0
      %p162 = por %p160, %p161
      %p163 = scmp.ne.s32.totalorder %s149, %s150
      %p164 = scmp.eq.s32.totalorder %s20, 1
      %p165 = por %p163, %p164
      %p167 = scmp.ne.s32.totalorder %s150, %s166
      %p168 = scmp.eq.s32.totalorder %s20, 0
      %p169 = por %p167, %p168
      %p170 = scmp.le.s32.totalorder 1, %s14
      %p171 = scmp.lt.s32.totalorder %s14, 3
      %p172 = pnand %p170, %p171
      %p173 = pneg %p172
      // Predicated region
      $region9: #{tpu_custom_call.1} parent=5 // pred_check
        _
      $region10: #{tpu_custom_call.1} parent=5 // pred_check_branch
        %175 = sbr.rel (%p172) target = $region12
      $region11: #{tpu_custom_call.1} parent=5 // pred_region
        %s176 = ssub.s32 %s14, 1
      $region12: #{tpu_custom_call.1} parent=5 // pred_fallthru
        _
      %p177 = scmp.lt.s32.totalorder %s14, 2
      // Predicated region
      $region13: #{tpu_custom_call.1} parent=5 // pred_check
        %p178 = pneg %p177
      $region14: #{tpu_custom_call.1} parent=5 // pred_check_branch
        %180 = sbr.rel (%p178) target = $region16
      $region15: #{tpu_custom_call.1} parent=5 // pred_region
        // Predicated region
        $region17: #{tpu_custom_call.1} parent=15 // pred_check
          %p181 = pneg %p48
        $region18: #{tpu_custom_call.1} parent=15 // pred_check_branch
          %183 = sbr.rel (%p181) target = $region20
        $region19: #{tpu_custom_call.1} parent=15 // pred_region
          %p184 = scmp.lt.s32.totalorder %s21, 1
          %s185 = scalar_select %p184, %s21, 1
          %p186 = scmp.lt.s32.totalorder %s22, 0
          %s187 = scalar_select %p186, %s22, 0
          %s188 = sadd.s32 %s187, %s185
          %s189 = smul.addr %s188, 8
          %s190 = scalar_lea.vmem %s0, %s189
        $region20: #{tpu_custom_call.1} parent=15 // pred_fallthru
          _
        // Predicated region
        $region21: #{tpu_custom_call.1} parent=15 // pred_check
          %p191 = pneg %p76
        $region22: #{tpu_custom_call.1} parent=15 // pred_check_branch
          %193 = sbr.rel (%p191) target = $region24
        $region23: #{tpu_custom_call.1} parent=15 // pred_region
          %s194 = sand.u32 %s66, 1
          %s195 = scalar_lea.sflag [#allocation5], %s194
          %s196 = sand.u32 %s66, 1
          %s197 = smul.addr %s196, 8
          %s198 = scalar_lea.vmem [#allocation4], %s197
          %s200 = ssub.s32 128, 128
          %201 = vsyncadd %s195, %s200
          %s202 = sadd.s32 %s22, %s21
          %s203 = smul.addr %s202, 128
          %s204 = scalar_lea.hbm %s1, %s203
          %s206 = sshll.u32 %s198, 4
          %s207 = int_to_ptr.vmem [resolvable:$true] %s206
          %209 = dma.hbm_to_vmem [thread:$0]  %s204, 128, %s207, %s195
        $region24: #{tpu_custom_call.1} parent=15 // pred_fallthru
          _
        // Predicated region
        $region25: #{tpu_custom_call.1} parent=15 // pred_check
          %p210 = pneg %p104
        $region26: #{tpu_custom_call.1} parent=15 // pred_check_branch
          %212 = sbr.rel (%p210) target = $region28
        $region27: #{tpu_custom_call.1} parent=15 // pred_region
          %p213 = scmp.lt.s32.totalorder %s21, 1
          %s214 = scalar_select %p213, %s21, 1
          %p215 = scmp.lt.s32.totalorder %s22, 0
          %s216 = scalar_select %p215, %s22, 0
          %s217 = sadd.s32 %s216, %s214
          %s218 = smul.addr %s217, 8
          %s219 = scalar_lea.vmem %s2, %s218
        $region28: #{tpu_custom_call.1} parent=15 // pred_fallthru
          _
      $region16: #{tpu_custom_call.1} parent=5 // pred_fallthru
        _
      %p220 = scmp.le.s32.totalorder 1, %s14
      %p221 = scmp.lt.s32.totalorder %s14, 3
      %p222 = pnand %p220, %p221
      %p223 = pneg %p222
      // Predicated region
      $region29: #{tpu_custom_call.1} parent=5 // pred_check
        _
      $region30: #{tpu_custom_call.1} parent=5 // pred_check_branch
        %225 = sbr.rel (%p222) target = $region32
      $region31: #{tpu_custom_call.1} parent=5 // pred_region
        %s226 = ssub.s32 %s14, 1
        %s227 = sand.u32 %s69, 1
        %s228 = scalar_lea.sflag [#allocation5], %s227
        %s229 = sand.u32 %s69, 1
        %s230 = smul.addr %s229, 8
        %s231 = scalar_lea.vmem [#allocation4], %s230
        // Predicated region
        $region33: #{tpu_custom_call.1} parent=31 // pred_check
          %p232 = pneg %p82
        $region34: #{tpu_custom_call.1} parent=31 // pred_check_branch
          %234 = sbr.rel (%p232) target = $region36
        $region35: #{tpu_custom_call.1} parent=31 // pred_region
          %235 = dma.done %s228, 128
        $region36: #{tpu_custom_call.1} parent=31 // pred_fallthru
          _
        %p236 = scmp.lt.s32.totalorder %s23, 1
        %s237 = scalar_select %p236, %s23, 1
        %p238 = scmp.lt.s32.totalorder %s24, 0
        %s239 = scalar_select %p238, %s24, 0
        %s240 = sadd.s32 %s239, %s237
        %s241 = smul.addr %s240, 8
        %s242 = scalar_lea.vmem %s0, %s241
        %p243 = pneg %p54
        %p244 = pneg %p51
        %s245 = sand.u32 %s69, 1
        %s246 = scalar_lea.sflag [#allocation5], %s245
        %s247 = sand.u32 %s69, 1
        %s248 = smul.addr %s247, 8
        %s249 = scalar_lea.vmem [#allocation4], %s248
        %p250 = pneg %p82
        %p251 = pneg %p79
        %p252 = scmp.lt.s32.totalorder %s23, 1
        %s253 = scalar_select %p252, %s23, 1
        %p254 = scmp.lt.s32.totalorder %s24, 0
        %s255 = scalar_select %p254, %s24, 0
        %s256 = sadd.s32 %s255, %s253
        %s257 = smul.addr %s256, 8
        %s258 = scalar_lea.vmem %s2, %s257
        %p259 = pneg %p110
        %p260 = pneg %p107
        %p261 = pneg %p136
        %p262 = pneg %p133
        %p263 = scmp.lt.s32.totalorder %s23, 1
        %s264 = scalar_select %p263, %s23, 1
        %s265 = scalar_lea.vmem %s3, %s264
        %p266 = pneg %p162
        %p267 = pneg %p159
        %p268 = scmp.lt.s32.totalorder %s23, 1
        %s269 = scalar_select %p268, %s23, 1
        %s270 = scalar_lea.vmem %s4, %s269
        %p271 = scmp.lt.s32.totalorder %s23, 1
        %s272 = scalar_select %p271, %s23, 1
        %p273 = scmp.lt.s32.totalorder %s24, 0
        %s274 = scalar_select %p273, %s24, 0
        %s275 = sadd.s32 %s274, %s272
        %s276 = smul.addr %s275, 8
        %s277 = scalar_lea.vmem %s0, %s276
        %p278 = scmp.lt.s32.totalorder %s23, 1
        %s279 = scalar_select %p278, %s23, 1
        %p280 = scmp.lt.s32.totalorder %s24, 0
        %s281 = scalar_select %p280, %s24, 0
        %s282 = sadd.s32 %s281, %s279
        %s283 = smul.addr %s282, 8
        %s284 = scalar_lea.vmem %s2, %s283
        %p285 = scmp.lt.s32.totalorder %s23, 1
        %s286 = scalar_select %p285, %s23, 1
        %s287 = scalar_lea.vmem %s3, %s286
        %p288 = scmp.lt.s32.totalorder %s23, 1
        %s289 = scalar_select %p288, %s23, 1
        %s290 = scalar_lea.vmem %s4, %s289
        %p291 = scmp.eq.s32.totalorder %s24, 0
        // Predicated region
        $region37: #{tpu_custom_call.1} parent=31 // pred_check
          %p292 = pneg %p291
        $region38: #{tpu_custom_call.1} parent=31 // pred_check_branch
          %294 = sbr.rel (%p292) target = $region40
        $region39: #{tpu_custom_call.1} parent=31 // pred_region
          %vm295 = vcmask 261120
          %296 = vst.msk [vmem:[#allocation2] sm:$0xff] %vm295, 0.0
          %vm297 = vcmask 7168
          %298 = vst.msk [vmem:[#allocation3] sm:$0xff] %vm297, 0.0
        $region40: #{tpu_custom_call.1} parent=31 // pred_fallthru
          _
        %v299 = vld [vmem:[%s277] sm:$0xff]
        %v300 = vld [vmem:[%s231] sm:$0xff]
        %v301 = vsub.f32 %v299, %v300
        %v302 = vld [vmem:[%s284] sm:$0xff]
        %v303 = vmul.f32 %v301, %v301
        %305 = vset.pattern.permute.xlu0 0
        %306 = vperm.xlu0 %305, %v302
        %v307 = vpop.permute.xlu0 %306
        %v309 = vmul.f32 %v303, %v307
        %v310 = vld [vmem:[#allocation2] sm:$0xff]
        %v311 = vadd.f32 %v309, 0.0
        %v312 = vadd.f32 %v310, %v311
        %vm313 = vcmask 261120
        %314 = vst.msk [vmem:[#allocation2] sm:$0xff] %vm313, %v312
        %v315 = vld [vmem:[#allocation3] sm:$0xff]
        %v316 = vadd.f32 %v302, 0.0
        %v317 = vadd.f32 %v315, %v316
        %vm318 = vcmask 7168
        %319 = vst.msk [vmem:[#allocation3] sm:$0xff] %vm318, %v317
        // Predicated region
        $region41: #{tpu_custom_call.1} parent=31 // pred_check
          %p320 = pneg %p291
        $region42: #{tpu_custom_call.1} parent=31 // pred_check_branch
          %322 = sbr.rel (%p320) target = $region44
        $region43: #{tpu_custom_call.1} parent=31 // pred_region
          %v323 = vld [vmem:[#allocation2] sm:$0xff]
          %v324 = vsel %vm313, %v323, 0.0
          %325 = vadd.xlane.f32.xlu0 %v324
          %v326 = vpop.xlane.xlu0 %325
          %v327 = vrot.slane %v326, 4
          %v328 = vadd.f32 %v326, %v327
          %v329 = vrot.slane %v328, 2
          %v330 = vadd.f32 %v328, %v329
          %v331 = vrot.slane %v330, 1
          %v332 = vadd.f32 %v330, %v331
          %s333 = vtos %v332
          %v334 = vstv %s333
          %vm335 = vcmask 0
          %336 = vst.msk [vmem:[%s287] sm:$0x1] %vm335, %v334
          %v337 = vld [vmem:[#allocation3] sm:$0xff]
          %v338 = vsel %vm318, %v337, 0.0
          %339 = vadd.xlane.f32.xlu0 %v338
          %v340 = vpop.xlane.xlu0 %339
          %v341 = vrot.slane %v340, 4
          %v342 = vadd.f32 %v340, %v341
          %v343 = vrot.slane %v342, 2
          %v344 = vadd.f32 %v342, %v343
          %v345 = vrot.slane %v344, 1
          %v346 = vadd.f32 %v344, %v345
          %s347 = vtos %v346
          %v348 = vstv %s347
          %349 = vst.msk [vmem:[%s290] sm:$0x1] %vm335, %v348
        $region44: #{tpu_custom_call.1} parent=31 // pred_fallthru
          _
        %p350 = scmp.lt.s32.totalorder %s23, 1
        %s351 = scalar_select %p350, %s23, 1
        %s352 = scalar_lea.vmem %s3, %s351
        %p353 = scmp.lt.s32.totalorder %s23, 1
        %s354 = scalar_select %p353, %s23, 1
        %s355 = scalar_lea.vmem %s4, %s354
        // Predicated region
        $region45: #{tpu_custom_call.1} parent=31 // pred_check
          %p356 = pneg %p133
        $region46: #{tpu_custom_call.1} parent=31 // pred_check_branch
          %358 = sbr.rel (%p356) target = $region48
        $region47: #{tpu_custom_call.1} parent=31 // pred_region
          _
        $region48: #{tpu_custom_call.1} parent=31 // pred_fallthru
          _
        // Predicated region
        $region49: #{tpu_custom_call.1} parent=31 // pred_check
          %p359 = pneg %p159
        $region50: #{tpu_custom_call.1} parent=31 // pred_check_branch
          %361 = sbr.rel (%p359) target = $region52
        $region51: #{tpu_custom_call.1} parent=31 // pred_region
          _
        $region52: #{tpu_custom_call.1} parent=31 // pred_fallthru
          _
      $region32: #{tpu_custom_call.1} parent=5 // pred_fallthru
        _
      %p362 = scmp.le.s32.totalorder 2, %s14
      // Predicated region
      $region53: #{tpu_custom_call.1} parent=5 // pred_check
        %p363 = pneg %p362
      $region54: #{tpu_custom_call.1} parent=5 // pred_check_branch
        %365 = sbr.rel (%p363) target = $region56
      $region55: #{tpu_custom_call.1} parent=5 // pred_region
        %s366 = ssub.s32 %s14, 2
        // Predicated region
        $region57: #{tpu_custom_call.1} parent=55 // pred_check
          %p367 = pneg %p139
        $region58: #{tpu_custom_call.1} parent=55 // pred_check_branch
          %369 = sbr.rel (%p367) target = $region60
        $region59: #{tpu_custom_call.1} parent=55 // pred_region
          %p370 = scmp.lt.s32.totalorder %s25, 1
          %s371 = scalar_select %p370, %s25, 1
          %s372 = scalar_lea.vmem %s3, %s371
        $region60: #{tpu_custom_call.1} parent=55 // pred_fallthru
          _
        // Predicated region
        $region61: #{tpu_custom_call.1} parent=55 // pred_check
          %p373 = pneg %p165
        $region62: #{tpu_custom_call.1} parent=55 // pred_check_branch
          %375 = sbr.rel (%p373) target = $region64
        $region63: #{tpu_custom_call.1} parent=55 // pred_region
          %p376 = scmp.lt.s32.totalorder %s25, 1
          %s377 = scalar_select %p376, %s25, 1
          %s378 = scalar_lea.vmem %s4, %s377
        $region64: #{tpu_custom_call.1} parent=55 // pred_fallthru
          _
      $region56: #{tpu_custom_call.1} parent=5 // pred_fallthru
        _
    $region6: #{tpu_custom_call.1} parent=1 // loop_footer
      %s18 = sadd.s32 1, %s14
    $region7: #{tpu_custom_call.1} parent=1 // loop_footer_branch
      %13 = sbr.rel target = $region3
    $region8: #{tpu_custom_call.1} parent=1 // loop_exit
      _
    %379 = vsyncpa [#allocation5], 1
    %s380 = scalar_lea.sflag [#allocation5], 1
    %381 = vsyncpa %s380, 1

</llo_original>
